<compile_context>
chip_gen: v5e
topology: v5e:2x2
jax: 0.10.0
libtpu: 0.0.40
codegen_flags: <defaults>
</compile_context>

<pallas_src>
import functools

import jax
import jax.numpy as jnp
from jax.experimental import pallas as pl
from jax.experimental.pallas import tpu as pltpu


# --------------------------------------------------------------------------- #
# Fused single-pass kernel: (bt, C, HW) tile resident in VMEM.
# --------------------------------------------------------------------------- #
def _se_fused_kernel(x_ref, w1t_ref, w2t_ref, o_ref, *, inv_hw):
    # x_ref:   (bt, C, HW); w1t_ref: (C, Cr); w2t_ref: (Cr, C); o_ref: (bt, C, HW)
    x = x_ref[...]

    # Squeeze: global average pool over spatial lanes, f32 accumulation.
    pooled = jnp.sum(x, axis=-1, dtype=jnp.float32) * inv_hw            # (bt, C)

    # Excite: Linear -> ReLU -> Linear -> Sigmoid.  Rows are independent, so a
    # ragged final batch block (undefined OOB rows) cannot contaminate valid rows.
    h = jnp.dot(pooled, w1t_ref[...], preferred_element_type=jnp.float32)
    h = jnp.maximum(h, 0.0)
    gate = jax.nn.sigmoid(jnp.dot(h, w2t_ref[...],
                                  preferred_element_type=jnp.float32))  # (bt, C)

    # Scale: broadcast per-(sample, channel) gate over spatial lanes.
    o_ref[...] = (x * gate[:, :, None].astype(x.dtype)).astype(o_ref.dtype)


# --------------------------------------------------------------------------- #
# Two-pass fallback (oversized tiles): pool kernel + scale kernel.
# --------------------------------------------------------------------------- #
def _se_pool_kernel(x_ref, pooled_ref, *, hw, hw_chunk, inv_hw):
    # x_ref: (1, C, hw_chunk); pooled_ref: (1, 1, C) f32, resident across h axis.
    h = pl.program_id(1)
    x = x_ref[...]
    col = jax.lax.broadcasted_iota(jnp.int32, x.shape, 2)
    valid = (h * hw_chunk + col) < hw                       # mask ragged spatial tail
    psum = jnp.sum(jnp.where(valid, x.astype(jnp.float32), 0.0),
                   axis=-1)[:, None, :]                     # (1, 1, C)

    @pl.when(h == 0)
    def _():
        pooled_ref[...] = jnp.zeros_like(pooled_ref)

    pooled_ref[...] += psum

    @pl.when(h == pl.num_programs(1) - 1)
    def _():
        pooled_ref[...] = pooled_ref[...] * inv_hw


def _se_scale_kernel(pooled_ref, w1t_ref, w2t_ref, x_ref, o_ref):
    # Gate is recomputed per spatial chunk (negligible: (1,C)@(C,Cr) matmuls).
    pooled = pooled_ref[...][:, 0, :]                       # (1, C) f32
    h = jnp.maximum(jnp.dot(pooled, w1t_ref[...],
                            preferred_element_type=jnp.float32), 0.0)
    gate = jax.nn.sigmoid(jnp.dot(h, w2t_ref[...],
                                  preferred_element_type=jnp.float32))  # (1, C)
    x = x_ref[...]                                          # (1, C, hw_chunk)
    o_ref[...] = (x * gate[:, :, None].astype(x.dtype)).astype(o_ref.dtype)


# --------------------------------------------------------------------------- #
# Wrapper
# --------------------------------------------------------------------------- #
def _tpu_core_info():
    """Return (single_tensorcore, scoped_vmem_cap_bytes) for the attached TPU."""
    try:
        kind = jax.devices()[0].device_kind.lower()
    except Exception:
        kind = ""
    single_tc = any(tag in kind for tag in
                    ("v5e", "v5 lite", "v5lite", "v6e", "v6 lite", "v6lite"))
    if single_tc:
        return True, 96 << 20      # 128 MiB physical VMEM -> generous scoped cap
    return False, 48 << 20         # v7x (64 MiB physical) / unknown -> conservative


def _se_fused(x_flat, w1t, w2t, B, C, Cr, HW, itemsize, single_tc, vmem_cap):
    per_sample_bytes = C * HW * itemsize

    # v5e/v6e: big tiles, no minimum grid-step count (single TC).
    # v7x/unknown: aim for >= 2 grid steps per TensorCore, but keep tiles >= ~1 MiB.
    target_tile_bytes = (16 << 20) if single_tc else (8 << 20)
    bt = max(1, min(B, target_tile_bytes // per_sample_bytes))
    if (not single_tc) and B > 1:
        bt_grid = max(1, pl.cdiv(B, 4))
        bt_floor = max(1, (1 << 20) // per_sample_bytes)
        bt = max(min(bt, bt_grid), min(bt, bt_floor))
    grid_b = pl.cdiv(B, bt)   # ragged final batch block is safe (rows independent)

    tile_bytes = bt * per_sample_bytes
    vmem_limit = int(min(max(6 * tile_bytes, 32 << 20), vmem_cap))

    cost = pl.CostEstimate(
        flops=2 * B * C * HW + 4 * B * C * Cr,
        transcendentals=B * C,
        bytes_accessed=2 * B * C * HW * itemsize + 2 * C * Cr * itemsize,
    )

    kernel = functools.partial(_se_fused_kernel, inv_hw=1.0 / HW)
    return pl.pallas_call(
        kernel,
        out_shape=jax.ShapeDtypeStruct((B, C, HW), x_flat.dtype),
        grid_spec=pltpu.PrefetchScalarGridSpec(
            num_scalar_prefetch=0,
            grid=(grid_b,),
            in_specs=[
                pl.BlockSpec((bt, C, HW), lambda b: (b, 0, 0)),
                pl.BlockSpec((C, Cr), lambda b: (0, 0)),
                pl.BlockSpec((Cr, C), lambda b: (0, 0)),
            ],
            out_specs=pl.BlockSpec((bt, C, HW), lambda b: (b, 0, 0)),
        ),
        compiler_params=pltpu.CompilerParams(
            dimension_semantics=("parallel",),
            vmem_limit_bytes=vmem_limit,
        ),
        cost_estimate=cost,
    )(x_flat, w1t, w2t)


def _se_two_pass(x_flat, w1t, w2t, B, C, Cr, HW, itemsize, vmem_cap, hw_chunk):
    # Lane-aligned spatial chunk that fits comfortably in VMEM.
    if hw_chunk is None:
        budget = max(1 << 20, vmem_cap // 8)
        max_chunk = max(128, ((budget // (C * itemsize)) // 128) * 128)
        hw_chunk = HW if HW <= max_chunk else max_chunk
    hw_chunk = min(hw_chunk, HW)
    n_hw = pl.cdiv(HW, hw_chunk)

    vmem_limit = int(min(max(8 * C * hw_chunk * itemsize, 32 << 20), vmem_cap))

    pool_kernel = functools.partial(_se_pool_kernel, hw=HW, hw_chunk=hw_chunk,
                                    inv_hw=1.0 / HW)
    pooled = pl.pallas_call(
        pool_kernel,
        out_shape=jax.ShapeDtypeStruct((B, 1, C), jnp.float32),
        grid_spec=pltpu.PrefetchScalarGridSpec(
            num_scalar_prefetch=0,
            grid=(B, n_hw),
            in_specs=[pl.BlockSpec((1, C, hw_chunk), lambda b, h: (b, 0, h))],
            out_specs=pl.BlockSpec((1, 1, C), lambda b, h: (b, 0, 0)),
        ),
        compiler_params=pltpu.CompilerParams(
            dimension_semantics=("parallel", "arbitrary"),
            vmem_limit_bytes=vmem_limit,
        ),
    )(x_flat)

    out = pl.pallas_call(
        _se_scale_kernel,
        out_shape=jax.ShapeDtypeStruct((B, C, HW), x_flat.dtype),
        grid_spec=pltpu.PrefetchScalarGridSpec(
            num_scalar_prefetch=0,
            grid=(B, n_hw),
            in_specs=[
                pl.BlockSpec((1, 1, C), lambda b, h: (b, 0, 0)),
                pl.BlockSpec((C, Cr), lambda b, h: (0, 0)),
                pl.BlockSpec((Cr, C), lambda b, h: (0, 0)),
                pl.BlockSpec((1, C, hw_chunk), lambda b, h: (b, 0, h)),
            ],
            out_specs=pl.BlockSpec((1, C, hw_chunk), lambda b, h: (b, 0, h)),
        ),
        compiler_params=pltpu.CompilerParams(
            dimension_semantics=("parallel", "parallel"),
            vmem_limit_bytes=vmem_limit,
        ),
    )(pooled, w1t, w2t, x_flat)
    return out


def se_layer(x, w1, w2, *, force_two_pass=False, two_pass_hw_chunk=None):
    """x: (B, C, H, W); w1: (Cr, C); w2: (C, Cr). Returns (B, C, H, W)."""
    B, C, H, W = x.shape
    Cr = w1.shape[0]
    HW = H * W
    itemsize = jnp.dtype(x.dtype).itemsize

    x_flat = x.reshape(B, C, HW)      # contiguous reshape: no extra HBM pass
    w1t = w1.T                        # (C, Cr)
    w2t = w2.T                        # (Cr, C)

    single_tc, vmem_cap = _tpu_core_info()
    per_sample_bytes = C * HW * itemsize
    w_bytes = 2 * C * Cr * itemsize

    # VMEM-fit guard: fused path needs double-buffered in+out tiles even at bt=1.
    fused_min_bytes = 4 * per_sample_bytes + 2 * w_bytes + (2 << 20)
    two_pass = force_two_pass or fused_min_bytes > vmem_cap

    if two_pass:
        out_flat = _se_two_pass(x_flat, w1t, w2t, B, C, Cr, HW, itemsize,
                                vmem_cap, two_pass_hw_chunk)
    else:
        out_flat = _se_fused(x_flat, w1t, w2t, B, C, Cr, HW, itemsize,
                             single_tc, vmem_cap)
    return out_flat.reshape(B, C, H, W)


def se_layer_ref(x, w1, w2):
    """Pure-JAX reference matching PyTorch SELayer.forward."""
    y = jnp.mean(x, axis=(2, 3))                     # AdaptiveAvgPool2d(1) + view
    y = jnp.maximum(y @ w1.T, 0.0)                   # Linear + ReLU
    y = jax.nn.sigmoid(y @ w2.T)                     # Linear + Sigmoid
    return x * y[:, :, None, None]


if __name__ == "__main__":
    key = jax.random.PRNGKey(0)
    kx, k1, k2, kx2 = jax.random.split(key, 4)

    # SELayer(channel=32, reduction=16) at a small spatial size.
    B, C, H, W = 2, 32, 8, 8
    reduction = 16
    Cr = C // reduction

    x = jax.random.normal(kx, (B, C, H, W), dtype=jnp.float32)
    w1 = jax.random.normal(k1, (Cr, C), dtype=jnp.float32) * (1.0 / jnp.sqrt(C))
    w2 = jax.random.normal(k2, (C, Cr), dtype=jnp.float32) * (1.0 / jnp.sqrt(Cr))

    out = se_layer(x, w1, w2)
    jax.block_until_ready(out)
    ref = se_layer_ref(x, w1, w2)
    assert out.shape == (B, C, H, W)
    assert jnp.allclose(out, ref, atol=1e-5, rtol=1e-5), "fused path mismatch"

    # Also exercise the two-pass VMEM-fallback path (ragged spatial chunking).
    x2 = jax.random.normal(kx2, (2, C, 20, 20), dtype=jnp.float32)
    out2 = se_layer(x2, w1, w2, force_two_pass=True, two_pass_hw_chunk=128)
    jax.block_until_ready(out2)
    ref2 = se_layer_ref(x2, w1, w2)
    assert jnp.allclose(out2, ref2, atol=1e-5, rtol=1e-5), "two-pass path mismatch"

    print("KERNEL_OK")
</pallas_src>

<mosaic_0001>
module attributes {stable_mosaic.version = 11 : i64} {
  func.func @_se_fused_kernel(%arg0: i32, %arg1: memref<2x32x64xf32, #tpu.memory_space<vmem>>, %arg2: memref<32x2xf32, #tpu.memory_space<vmem>>, %arg3: memref<2x32xf32, #tpu.memory_space<vmem>>, %arg4: memref<2x32x64xf32, #tpu.memory_space<vmem>>) attributes {dimension_semantics = [#tpu.dimension_semantics<parallel>], iteration_bounds = array<i64: 1>, scalar_prefetch = 0 : i64, scratch_operands = 0 : i64, tpu.core_type = #tpu.core_type<tc>, window_params = [{transform_indices = @transform_0, window_bounds = array<i64: 2, 32, 64>}, {pipeline_mode = #tpu.pipeline_mode<synchronous>, transform_indices = @transform_1, window_bounds = array<i64: 32, 2>}, {pipeline_mode = #tpu.pipeline_mode<synchronous>, transform_indices = @transform_2, window_bounds = array<i64: 2, 32>}, {transform_indices = @transform_3, window_bounds = array<i64: 2, 32, 64>}]} {
    %c0 = arith.constant 0 : index
    %c0_0 = arith.constant 0 : index
    %c0_1 = arith.constant 0 : index
    %0 = vector.load %arg1[%c0, %c0_0, %c0_1] : memref<2x32x64xf32, #tpu.memory_space<vmem>>, vector<2x32x64xf32>
    %cst = arith.constant dense<0.000000e+00> : vector<2x32xf32>
    %1 = vector.multi_reduction <add>, %0, %cst [2] : vector<2x32x64xf32> to vector<2x32xf32>
    %cst_2 = arith.constant 1.562500e-02 : f32
    %2 = vector.broadcast %cst_2 : f32 to vector<2x32xf32>
    %3 = arith.mulf %1, %2 : vector<2x32xf32>
    %c0_3 = arith.constant 0 : index
    %c0_4 = arith.constant 0 : index
    %4 = vector.load %arg2[%c0_3, %c0_4] : memref<32x2xf32, #tpu.memory_space<vmem>>, vector<32x2xf32>
    %cst_5 = arith.constant dense<0.000000e+00> : vector<2x2xf32>
    %5 = tpu.matmul %3, %4, %cst_5 {dimension_numbers = #tpu.dot_dimension_numbers<[1], [0], [0], [1], [0, 0, 1, 1], [], []>} : vector<2x32xf32>, vector<32x2xf32>, vector<2x2xf32> -> vector<2x2xf32>
    %cst_6 = arith.constant 0.000000e+00 : f32
    %6 = vector.broadcast %cst_6 : f32 to vector<2x2xf32>
    %7 = arith.maximumf %5, %6 : vector<2x2xf32>
    %c0_7 = arith.constant 0 : index
    %c0_8 = arith.constant 0 : index
    %8 = vector.load %arg3[%c0_7, %c0_8] : memref<2x32xf32, #tpu.memory_space<vmem>>, vector<2x32xf32>
    %cst_9 = arith.constant dense<0.000000e+00> : vector<2x32xf32>
    %9 = tpu.matmul %7, %8, %cst_9 {dimension_numbers = #tpu.dot_dimension_numbers<[1], [0], [0], [1], [0, 0, 1, 1], [], []>} : vector<2x2xf32>, vector<2x32xf32>, vector<2x32xf32> -> vector<2x32xf32>
    %10 = arith.negf %9 : vector<2x32xf32>
    %11 = math.exp %10 : vector<2x32xf32>
    %cst_10 = arith.constant 1.000000e+00 : f32
    %12 = vector.broadcast %cst_10 : f32 to vector<2x32xf32>
    %13 = arith.addf %12, %11 : vector<2x32xf32>
    %14 = arith.divf %12, %13 : vector<2x32xf32>
    %15 = vector.shape_cast %14 : vector<2x32xf32> to vector<2x32x1xf32>
    %16 = vector.broadcast %15 : vector<2x32x1xf32> to vector<2x32x64xf32>
    %17 = arith.mulf %0, %16 : vector<2x32x64xf32>
    %c0_11 = arith.constant 0 : index
    %c0_12 = arith.constant 0 : index
    %c0_13 = arith.constant 0 : index
    %18 = vector.load %arg4[%c0_11, %c0_12, %c0_13] : memref<2x32x64xf32, #tpu.memory_space<vmem>>, vector<2x32x64xf32>
    tpu.vector_store %arg4[%c0_11, %c0_12, %c0_13], %17 {strides = array<i32>} : memref<2x32x64xf32, #tpu.memory_space<vmem>>, vector<2x32x64xf32>,
    return
  }
  func.func @transform_0(%arg0: i32) -> (i32, i32, i32) {
    %c0_i32 = arith.constant 0 : i32
    %c0_i32_0 = arith.constant 0 : i32
    %c0_i32_1 = arith.constant 0 : i32
    return %arg0, %c0_i32, %c0_i32_0 : i32, i32, i32
  }
  func.func @transform_1(%arg0: i32) -> (i32, i32) {
    %c0_i32 = arith.constant 0 : i32
    %c0_i32_0 = arith.constant 0 : i32
    %c0_i32_1 = arith.constant 0 : i32
    return %c0_i32, %c0_i32_0 : i32, i32
  }
  func.func @transform_2(%arg0: i32) -> (i32, i32) {
    %c0_i32 = arith.constant 0 : i32
    %c0_i32_0 = arith.constant 0 : i32
    %c0_i32_1 = arith.constant 0 : i32
    return %c0_i32, %c0_i32_0 : i32, i32
  }
  func.func @transform_3(%arg0: i32) -> (i32, i32, i32) {
    %c0_i32 = arith.constant 0 : i32
    %c0_i32_0 = arith.constant 0 : i32
    %c0_i32_1 = arith.constant 0 : i32
    return %arg0, %c0_i32, %c0_i32_0 : i32, i32, i32
  }
}

</mosaic_0001>

<llo_original>
// kernel: tpu_custom_call.1
$region0: #{tpu_custom_call.1}
  #allocation0 [shape = 'u32[]', space=smem, size = 0x4, offset = 0x4, fixed_abs, tag = 'smem constant byte address 0x4 - core index']
  #allocation1 [shape = 'u32[72,128]{1,0:T(1,128)}', space=vmem, size = 0x9000, scoped, tag = 'internal scratch']
  %s0 = inlined_call_operand.hbm [shape: f32[2,32,64], index: 0, kind: input, shape index: {}]
  %s1 = inlined_call_operand.vmem [shape: f32[32,2], index: 1, kind: input, shape index: {}]
  %s2 = inlined_call_operand.vmem [shape: f32[2,32], index: 2, kind: input, shape index: {}]
  %s3 = inlined_call_operand.hbm [shape: f32[2,32,64], index: 3, kind: output, shape index: {}]
  %s4 = sld [smem:[#allocation0]]
  $region26: #{tpu_custom_call.1} parent=0
    _
  %s6 = ssub.s32 1, %s4
  %s7 = scalar_select 0, %s6, %s4
  $region1: #{tpu_custom_call.1} parent=0
    #allocation2 [shape = 'u8[32768]{0}', space=vmem, size = 0x8000, scoped, tag = 'input window, operand 0, single buffered']
    #allocation3 [shape = 's32[1]{0}', space=sflag, size = 0x4, scoped, tag = 'scoped memory for tpu_custom_call.1']
    #allocation4 [shape = 's32[1]{0}', space=sflag, size = 0x4, scoped, tag = 'scoped memory for tpu_custom_call.1']
    #allocation5 [shape = 'u8[32768]{0}', space=vmem, size = 0x8000, scoped, tag = 'output window, operand 0, single buffered']
    %8 = vsyncpa [#allocation3], 0
    %9 = vsyncpa [#allocation4], 0
    // Predicated region
    $region2: #{tpu_custom_call.1} parent=1 // pred_check
      _
    $region3: #{tpu_custom_call.1} parent=1 // pred_check_branch
      %11 = sbr.rel (0) target = $region5
    $region4: #{tpu_custom_call.1} parent=1 // pred_region
      %13 = vsyncadd [#allocation3], 0
      %s14 = sshll.u32 %s0, 4
      %s15 = int_to_ptr.hbm [resolvable:$true] %s14
      %s16 = sshll.u32 [#allocation2], 4
      %s17 = int_to_ptr.vmem [resolvable:$true] %s16
      %22 = dma.hbm_to_vmem [thread:$0]  %s15, 1024, %s17, [#allocation3], 128, 128, 8
    $region5: #{tpu_custom_call.1} parent=1 // pred_fallthru
      _
    // Predicated region
    $region6: #{tpu_custom_call.1} parent=1 // pred_check
      _
    $region7: #{tpu_custom_call.1} parent=1 // pred_check_branch
      %24 = sbr.rel (0) target = $region9
    $region8: #{tpu_custom_call.1} parent=1 // pred_region
      _
    $region9: #{tpu_custom_call.1} parent=1 // pred_fallthru
      _
    // Predicated region
    $region10: #{tpu_custom_call.1} parent=1 // pred_check
      _
    $region11: #{tpu_custom_call.1} parent=1 // pred_check_branch
      %26 = sbr.rel (0) target = $region13
    $region12: #{tpu_custom_call.1} parent=1 // pred_region
      _
    $region13: #{tpu_custom_call.1} parent=1 // pred_fallthru
      _
    // Predicated region
    $region14: #{tpu_custom_call.1} parent=1 // pred_check
      _
    $region15: #{tpu_custom_call.1} parent=1 // pred_check_branch
      %28 = sbr.rel (0) target = $region17
    $region16: #{tpu_custom_call.1} parent=1 // pred_region
      %30 = dma.done [#allocation3], 1024
    $region17: #{tpu_custom_call.1} parent=1 // pred_fallthru
      _
    %v31 = vld [vmem:[#allocation2] sm:$0xff]
    %v32 = vld [vmem:[#allocation2 + $0x8] sm:$0xff]
    %v33 = vld [vmem:[#allocation2 + $0x10] sm:$0xff]
    %v34 = vld [vmem:[#allocation2 + $0x18] sm:$0xff]
    %v35 = vld [vmem:[#allocation2 + $0x20] sm:$0xff]
    %v36 = vld [vmem:[#allocation2 + $0x28] sm:$0xff]
    %v37 = vld [vmem:[#allocation2 + $0x30] sm:$0xff]
    %v38 = vld [vmem:[#allocation2 + $0x38] sm:$0xff]
    %vm39 = vcmask 523264
    %v40 = vsel %vm39, %v31, 0.0
    %41 = vadd.xlane.f32.xlu0 %v40
    %v42 = vpop.xlane.xlu0 %41
    %v43 = vsel %vm39, %v32, 0.0
    %44 = vadd.xlane.f32.xlu0 %v43
    %v45 = vpop.xlane.xlu0 %44
    %v46 = vsel %vm39, %v33, 0.0
    %47 = vadd.xlane.f32.xlu0 %v46
    %v48 = vpop.xlane.xlu0 %47
    %v49 = vsel %vm39, %v34, 0.0
    %50 = vadd.xlane.f32.xlu0 %v49
    %v51 = vpop.xlane.xlu0 %50
    %v52 = vsel %vm39, %v35, 0.0
    %53 = vadd.xlane.f32.xlu0 %v52
    %v54 = vpop.xlane.xlu0 %53
    %v55 = vsel %vm39, %v36, 0.0
    %56 = vadd.xlane.f32.xlu0 %v55
    %v57 = vpop.xlane.xlu0 %56
    %v58 = vsel %vm39, %v37, 0.0
    %59 = vadd.xlane.f32.xlu0 %v58
    %v60 = vpop.xlane.xlu0 %59
    %v61 = vsel %vm39, %v38, 0.0
    %62 = vadd.xlane.f32.xlu0 %v61
    %v63 = vpop.xlane.xlu0 %62
    %v64 = vmul.f32 %v42, 0.015625
    %v65 = vmul.f32 %v45, 0.015625
    %v66 = vmul.f32 %v48, 0.015625
    %v67 = vmul.f32 %v51, 0.015625
    %v68 = vmul.f32 %v54, 0.015625
    %v69 = vmul.f32 %v57, 0.015625
    %v70 = vmul.f32 %v60, 0.015625
    %v71 = vmul.f32 %v63, 0.015625
    %v72 = vld [vmem:[%s1] sm:$0xff]
    %v73 = vld [vmem:[%s1 + $0x8] sm:$0xff]
    %v74 = vld [vmem:[%s1 + $0x10] sm:$0xff]
    %v75 = vld [vmem:[%s1 + $0x18] sm:$0xff]
    %v84 = vlaneseq
    %v85 = vand.u32 %v84, 127
    %v86 = vperm.slane %v64, %v85
    %v87 = vadd.s32 %v85, 4294967288
    %v88 = vperm.slane %v65, %v87
    %vm89 = vcmask 130112
    %v90 = vsel %vm89, %v88, %v86
    %v91 = vadd.s32 %v85, 4294967280
    %v92 = vperm.slane %v66, %v91
    %vm93 = vcmask 195712
    %v94 = vsel %vm93, %v92, %v90
    %v95 = vadd.s32 %v85, 4294967272
    %v96 = vperm.slane %v67, %v95
    %vm97 = vcmask 261312
    %v98 = vsel %vm97, %v96, %v94
    %v99 = vperm.slane %v68, %v85
    %v100 = vperm.slane %v69, %v87
    %v101 = vsel %vm89, %v100, %v99
    %v102 = vperm.slane %v70, %v91
    %v103 = vsel %vm93, %v102, %v101
    %v104 = vperm.slane %v71, %v95
    %v105 = vsel %vm97, %v104, %v103
    %vm106 = vcmask 1041409
    %v107 = vsel %vm106, %v105, %v98
    %vm108 = vcmask 261120
    %v109 = vsel %vm108, %v107, 0
    %111 = vmatpush.msra.mxu0 0.0
    %112 = vmatpush.msra.mxu0 0.0
    %113 = vmatpush.msra.mxu0 0.0
    %114 = vmatpush.msra.mxu0 0.0
    %115 = vmatpush.msra.mxu0 0.0
    %116 = vmatpush.msra.mxu0 0.0
    %117 = vmatpush.msra.mxu0 0.0
    %118 = vmatpush.msra.mxu0 0.0
    %119 = vmatpush.msra.mxu0 0.0
    %120 = vmatpush.msra.mxu0 0.0
    %121 = vmatpush.msra.mxu0 0.0
    %122 = vmatpush.msra.mxu0 0.0
    %123 = vmatpush.msra.mxu0 %v75
    %124 = vmatpush.msra.mxu0 %v74
    %125 = vmatpush.msra.mxu0 %v73
    %126 = vmatpush.msra.mxu0 %v72
    %127 = vmatmul.f32.gmra.mxu0 %v109
    %v128 = vpop.f32.mrf.mxu0
    %v129 = vadd.f32 0.0, %v128
    %130 = vdwg.mxu0
    %v131 = vmax.f32 %v129, 0.0
    %v132 = vld [vmem:[%s2] sm:$0x3]
    %vm133 = vcmask 15360
    %v135 = vsel %vm133, %v131, 0
    %vm137 = vcmask 1041408
    %v139 = vsel %vm137, %v132, 0
    %141 = vmatpush.msra.mxu0 0.0
    %142 = vmatpush.msra.mxu0 0.0
    %143 = vmatpush.msra.mxu0 0.0
    %144 = vmatpush.msra.mxu0 0.0
    %145 = vmatpush.msra.mxu0 0.0
    %146 = vmatpush.msra.mxu0 0.0
    %147 = vmatpush.msra.mxu0 0.0
    %148 = vmatpush.msra.mxu0 0.0
    %149 = vmatpush.msra.mxu0 0.0
    %150 = vmatpush.msra.mxu0 0.0
    %151 = vmatpush.msra.mxu0 0.0
    %152 = vmatpush.msra.mxu0 0.0
    %153 = vmatpush.msra.mxu0 0.0
    %154 = vmatpush.msra.mxu0 0.0
    %155 = vmatpush.msra.mxu0 0.0
    %156 = vmatpush.msra.mxu0 %v139
    %157 = vmatmul.f32.gmra.mxu0 %v135
    %v158 = vpop.f32.mrf.mxu0
    %v159 = vadd.f32 0.0, %v158
    %160 = vdwg.mxu0
    %v161 = vxor.u32 %v159, 2147483648
    %v162 = vmul.f32 %v161, 1.442695
    %v163 = vpow.pop %v162
    %v164 = vadd.f32 %v163, 1.0
    %v165 = vrcp.pop %v164
    %v166 = vmul.f32 %v164, %v165
    %v167 = vsub.f32 1.0, %v166
    %v168 = vmul.f32 %v165, %v167
    %v169 = vadd.f32 %v165, %v168
    %vm170 = vweird.f32 %v164
    %vm171 = vweird.f32 %v165
    %vm172 = vmor %vm170, %vm171
    %v173 = vsel %vm172, %v165, %v169
    %v174 = vand.u32 2147483647, %v164
    %vm175 = vcmp.eq.f32.partialorder %v174, 8.507059e+37
    %v176 = vand.u32 %v164, 2147483648
    %v177 = vor.u32 1.1754944e-38, %v176
    %v178 = vsel %vm175, %v177, %v173
    %v179 = vmul.f32 1.0, %v178
    %v180 = vperm.slane %v179, 0
    %v181 = vlaneseq
    %v182 = vshrl.u32 %v181, 7
    %184 = vset.pattern.permute.xlu0 %v182
    %185 = vperm.xlu0 %184, %v180
    %v186 = vpop.permute.xlu0 %185
    %v187 = vlaneseq
    %v188 = vshrl.u32 %v187, 7
    %v189 = vadd.s32 %v188, 8
    %190 = vset.pattern.permute.xlu0 %v189
    %191 = vperm.xlu0 %190, %v180
    %v192 = vpop.permute.xlu0 %191
    %v193 = vlaneseq
    %v194 = vshrl.u32 %v193, 7
    %v195 = vadd.s32 %v194, 16
    %196 = vset.pattern.permute.xlu0 %v195
    %197 = vperm.xlu0 %196, %v180
    %v198 = vpop.permute.xlu0 %197
    %v199 = vlaneseq
    %v200 = vshrl.u32 %v199, 7
    %v201 = vadd.s32 %v200, 24
    %202 = vset.pattern.permute.xlu0 %v201
    %203 = vperm.xlu0 %202, %v180
    %v204 = vpop.permute.xlu0 %203
    %v205 = vperm.slane %v179, 1
    %v206 = vlaneseq
    %v207 = vshrl.u32 %v206, 7
    %209 = vset.pattern.permute.xlu0 %v207
    %210 = vperm.xlu0 %209, %v205
    %v211 = vpop.permute.xlu0 %210
    %v212 = vlaneseq
    %v213 = vshrl.u32 %v212, 7
    %v214 = vadd.s32 %v213, 8
    %215 = vset.pattern.permute.xlu0 %v214
    %216 = vperm.xlu0 %215, %v205
    %v217 = vpop.permute.xlu0 %216
    %v218 = vlaneseq
    %v219 = vshrl.u32 %v218, 7
    %v220 = vadd.s32 %v219, 16
    %221 = vset.pattern.permute.xlu0 %v220
    %222 = vperm.xlu0 %221, %v205
    %v223 = vpop.permute.xlu0 %222
    %v224 = vlaneseq
    %v225 = vshrl.u32 %v224, 7
    %v226 = vadd.s32 %v225, 24
    %227 = vset.pattern.permute.xlu0 %v226
    %228 = vperm.xlu0 %227, %v205
    %v229 = vpop.permute.xlu0 %228
    %v230 = vmul.f32 %v31, %v186
    %v231 = vmul.f32 %v32, %v192
    %v232 = vmul.f32 %v33, %v198
    %v233 = vmul.f32 %v34, %v204
    %v234 = vmul.f32 %v35, %v211
    %v235 = vmul.f32 %v36, %v217
    %v236 = vmul.f32 %v37, %v223
    %v237 = vmul.f32 %v38, %v229
    %238 = vst.msk [vmem:[#allocation5] sm:$0xff] %vm39, %v230
    %239 = vst.msk [vmem:[#allocation5 + $0x8] sm:$0xff] %vm39, %v231
    %240 = vst.msk [vmem:[#allocation5 + $0x10] sm:$0xff] %vm39, %v232
    %241 = vst.msk [vmem:[#allocation5 + $0x18] sm:$0xff] %vm39, %v233
    %242 = vst.msk [vmem:[#allocation5 + $0x20] sm:$0xff] %vm39, %v234
    %243 = vst.msk [vmem:[#allocation5 + $0x28] sm:$0xff] %vm39, %v235
    %244 = vst.msk [vmem:[#allocation5 + $0x30] sm:$0xff] %vm39, %v236
    %245 = vst.msk [vmem:[#allocation5 + $0x38] sm:$0xff] %vm39, %v237
    // Predicated region
    $region18: #{tpu_custom_call.1} parent=1 // pred_check
      _
    $region19: #{tpu_custom_call.1} parent=1 // pred_check_branch
      %247 = sbr.rel (0) target = $region21
    $region20: #{tpu_custom_call.1} parent=1 // pred_region
      %249 = vsyncadd [#allocation4], 0
      %s250 = sshll.u32 [#allocation5], 4
      %s251 = int_to_ptr.vmem [resolvable:$true] %s250
      %s252 = sshll.u32 %s3, 4
      %s253 = int_to_ptr.hbm [resolvable:$true] %s252
      %258 = dma.vmem_to_hbm [thread:$0]  %s251, 1024, %s253, [#allocation4], 128, 128, 8
    $region21: #{tpu_custom_call.1} parent=1 // pred_fallthru
      _
    // Predicated region
    $region22: #{tpu_custom_call.1} parent=1 // pred_check
      _
    $region23: #{tpu_custom_call.1} parent=1 // pred_check_branch
      %260 = sbr.rel (0) target = $region25
    $region24: #{tpu_custom_call.1} parent=1 // pred_region
      %262 = dma.done [#allocation4], 1024
    $region25: #{tpu_custom_call.1} parent=1 // pred_fallthru
      _
    %263 = vsyncpa [#allocation3], 1
    %264 = vsyncpa [#allocation4], 1

</llo_original>
